<compile_context>
chip_gen: v5e
topology: v5e:2x2
jax: 0.10.0
libtpu: 0.0.40
codegen_flags: <defaults>
</compile_context>

<pallas_src>
import jax
import jax.numpy as jnp
from jax.experimental import pallas as pl
from jax.experimental.pallas import tpu as pltpu

_LANE = 128
_MAX_ROWS = 4096        # 8 MiB input + 2 MiB output per block (f32)
_MIN_ROWS = 1024        # tile floor when splitting the grid for multi-TC chips
_MIN_GRID_STEPS = 8     # target grid steps so v7x's two TensorCores both stream
_VMEM_LIMIT = 48 << 20  # > ~20 MiB double-buffered need; <= 64 MiB v7x physical


def _gen_b2a_kernel(w_ref, x_ref, o_ref):
    # w_ref : SMEM (4,) f32 scalar-prefetch — [w_R, w_G, w_B, w_N]
    # x_ref : VMEM (1, 4, row_tile, 128) — one spatial tile, all 4 channels
    # o_ref : VMEM (1, 1, row_tile, 128)
    o_ref[0, 0, :, :] = (
        x_ref[0, 0, :, :] * w_ref[0]
        + x_ref[0, 1, :, :] * w_ref[1]
        + x_ref[0, 2, :, :] * w_ref[2]
        + x_ref[0, 3, :, :] * w_ref[3]
    )


def _num_tensorcores():
    # Best-effort: only v7x has 2 TensorCores per chip sharing HBM bandwidth.
    try:
        kind = jax.devices()[0].device_kind.lower()
    except Exception:
        return 1
    return 2 if "v7" in kind else 1


def _round_up(x, m):
    return ((x + m - 1) // m) * m


def _choose_row_tile(batch, n_rows):
    """Pick (row_tile, num_tiles) for the spatial grid axis."""
    num_tiles = pl.cdiv(n_rows, _MAX_ROWS)
    if _num_tensorcores() > 1 and batch * num_tiles < _MIN_GRID_STEPS:
        # Give both TensorCores work, but keep tiles large enough that the
        # per-step pipeline overhead (~0.35 us) stays small.
        want = pl.cdiv(_MIN_GRID_STEPS, batch)
        cap = max(1, n_rows // _MIN_ROWS)
        num_tiles = max(num_tiles, min(want, cap))
    if num_tiles <= 1:
        return n_rows, 1                      # single full-extent block
    row_tile = _round_up(pl.cdiv(n_rows, num_tiles), 8)   # (8,128) rule
    return row_tile, pl.cdiv(n_rows, row_tile)            # last block is clipped


def generator_b2a_forward(x, weights):
    """x: (B, 4, H, W) f32; weights: (4,) f32 -> (B, 1, H, W) f32."""
    B, C, H, W = x.shape
    assert C == 4, "Generator_B2A expects 4 input channels (R, G, B, N)"
    hw = H * W

    # Lane-dense (n_rows, 128) slab. Pad only to the 128-lane boundary; when
    # H*W is already lane-aligned this is a pure reshape (no HBM copy).
    n_rows = pl.cdiv(hw, _LANE)
    hw_pad = n_rows * _LANE

    x_flat = x.reshape(B, 4, hw)
    if hw_pad != hw:
        x_flat = jnp.pad(x_flat, ((0, 0), (0, 0), (0, hw_pad - hw)))
    x_slab = x_flat.reshape(B, 4, n_rows, _LANE)

    row_tile, num_tiles = _choose_row_tile(B, n_rows)

    out_slab = pl.pallas_call(
        _gen_b2a_kernel,
        out_shape=jax.ShapeDtypeStruct((B, 1, n_rows, _LANE), x.dtype),
        grid_spec=pltpu.PrefetchScalarGridSpec(
            num_scalar_prefetch=1,                 # weights -> SMEM, read once
            grid=(B, num_tiles),
            in_specs=[
                # one spatial tile (all 4 channels) per step — lane-dense,
                # full unmasked vst on the output
                pl.BlockSpec((1, 4, row_tile, _LANE),
                             lambda b, t, w: (b, 0, t, 0)),
            ],
            out_specs=pl.BlockSpec((1, 1, row_tile, _LANE),
                                   lambda b, t, w: (b, 0, t, 0)),
        ),
        compiler_params=pltpu.CompilerParams(
            dimension_semantics=("parallel", "parallel"),
            vmem_limit_bytes=_VMEM_LIMIT,
        ),
    )(weights, x_slab)

    out_flat = out_slab.reshape(B, 1, hw_pad)
    if hw_pad != hw:
        out_flat = out_flat[:, :, :hw]
    return out_flat.reshape(B, 1, H, W)


def _reference(x, weights):
    return (
        x[:, 0, :, :] * weights[0]
        + x[:, 1, :, :] * weights[1]
        + x[:, 2, :, :] * weights[2]
        + x[:, 3, :, :] * weights[3]
    )[:, None, :, :]


if __name__ == "__main__":
    # Deterministic parameters (as in Generator_B2A.__init__: all 0.25)
    weights = jnp.array([0.25, 0.25, 0.25, 0.25], dtype=jnp.float32)

    key = jax.random.PRNGKey(0)

    # Primary test: NCHW, C=4, small spatial extent (lane-aligned: H*W = 256)
    x = jax.random.normal(key, (2, 4, 16, 16), dtype=jnp.float32)
    out = jax.block_until_ready(generator_b2a_forward(x, weights))
    assert out.shape == (2, 1, 16, 16)
    assert jnp.allclose(out, _reference(x, weights), atol=1e-6), "mismatch vs reference"

    # Secondary test: H*W not a multiple of 128 (exercises the lane-pad path)
    x2 = jax.random.normal(jax.random.PRNGKey(1), (1, 4, 10, 13), dtype=jnp.float32)
    out2 = jax.block_until_ready(generator_b2a_forward(x2, weights))
    assert out2.shape == (1, 1, 10, 13)
    assert jnp.allclose(out2, _reference(x2, weights), atol=1e-6), "mismatch (padded case)"

    print("KERNEL_OK")
</pallas_src>

<mosaic_0001>
module attributes {stable_mosaic.version = 11 : i64} {
  func.func @_gen_b2a_kernel(%arg0: i32, %arg1: i32, %arg2: memref<4xf32, #tpu.memory_space<smem>>, %arg3: memref<1x4x2x128xf32, #tpu.memory_space<vmem>>, %arg4: memref<1x1x2x128xf32, #tpu.memory_space<vmem>>) attributes {dimension_semantics = [#tpu.dimension_semantics<parallel>, #tpu.dimension_semantics<parallel>], iteration_bounds = array<i64: 2, 1>, scalar_prefetch = 1 : i64, scratch_operands = 0 : i64, tpu.core_type = #tpu.core_type<tc>, window_params = [{transform_indices = @transform_0, window_bounds = array<i64: 1, 4, 2, 128>}, {transform_indices = @transform_1, window_bounds = array<i64: 1, 1, 2, 128>}]} {
    %c0 = arith.constant 0 : index
    %c0_0 = arith.constant 0 : index
    %c0_1 = arith.constant 0 : index
    %c0_2 = arith.constant 0 : index
    %0 = vector.load %arg3[%c0, %c0_0, %c0_1, %c0_2] : memref<1x4x2x128xf32, #tpu.memory_space<vmem>>, vector<1x1x2x128xf32>
    %1 = vector.shape_cast %0 : vector<1x1x2x128xf32> to vector<2x128xf32>
    %c0_3 = arith.constant 0 : index
    %2 = memref.load %arg2[%c0_3] : memref<4xf32, #tpu.memory_space<smem>>
    %3 = vector.broadcast %2 : f32 to vector<2x128xf32>
    %4 = arith.mulf %1, %3 : vector<2x128xf32>
    %c0_4 = arith.constant 0 : index
    %c1 = arith.constant 1 : index
    %c0_5 = arith.constant 0 : index
    %c0_6 = arith.constant 0 : index
    %5 = vector.load %arg3[%c0_4, %c1, %c0_5, %c0_6] : memref<1x4x2x128xf32, #tpu.memory_space<vmem>>, vector<1x1x2x128xf32>
    %6 = vector.shape_cast %5 : vector<1x1x2x128xf32> to vector<2x128xf32>
    %c1_7 = arith.constant 1 : index
    %7 = memref.load %arg2[%c1_7] : memref<4xf32, #tpu.memory_space<smem>>
    %8 = vector.broadcast %7 : f32 to vector<2x128xf32>
    %9 = arith.mulf %6, %8 : vector<2x128xf32>
    %10 = arith.addf %4, %9 : vector<2x128xf32>
    %c0_8 = arith.constant 0 : index
    %c2 = arith.constant 2 : index
    %c0_9 = arith.constant 0 : index
    %c0_10 = arith.constant 0 : index
    %11 = vector.load %arg3[%c0_8, %c2, %c0_9, %c0_10] : memref<1x4x2x128xf32, #tpu.memory_space<vmem>>, vector<1x1x2x128xf32>
    %12 = vector.shape_cast %11 : vector<1x1x2x128xf32> to vector<2x128xf32>
    %c2_11 = arith.constant 2 : index
    %13 = memref.load %arg2[%c2_11] : memref<4xf32, #tpu.memory_space<smem>>
    %14 = vector.broadcast %13 : f32 to vector<2x128xf32>
    %15 = arith.mulf %12, %14 : vector<2x128xf32>
    %16 = arith.addf %10, %15 : vector<2x128xf32>
    %c0_12 = arith.constant 0 : index
    %c3 = arith.constant 3 : index
    %c0_13 = arith.constant 0 : index
    %c0_14 = arith.constant 0 : index
    %17 = vector.load %arg3[%c0_12, %c3, %c0_13, %c0_14] : memref<1x4x2x128xf32, #tpu.memory_space<vmem>>, vector<1x1x2x128xf32>
    %18 = vector.shape_cast %17 : vector<1x1x2x128xf32> to vector<2x128xf32>
    %c3_15 = arith.constant 3 : index
    %19 = memref.load %arg2[%c3_15] : memref<4xf32, #tpu.memory_space<smem>>
    %20 = vector.broadcast %19 : f32 to vector<2x128xf32>
    %21 = arith.mulf %18, %20 : vector<2x128xf32>
    %22 = arith.addf %16, %21 : vector<2x128xf32>
    %c0_16 = arith.constant 0 : index
    %c0_17 = arith.constant 0 : index
    %c0_18 = arith.constant 0 : index
    %c0_19 = arith.constant 0 : index
    %23 = vector.load %arg4[%c0_16, %c0_17, %c0_18, %c0_19] : memref<1x1x2x128xf32, #tpu.memory_space<vmem>>, vector<1x1x2x128xf32>
    %24 = vector.shape_cast %23 : vector<1x1x2x128xf32> to vector<2x128xf32>
    %25 = vector.shape_cast %22 : vector<2x128xf32> to vector<1x1x2x128xf32>
    tpu.vector_store %arg4[%c0_16, %c0_17, %c0_18, %c0_19], %25 {strides = array<i32>} : memref<1x1x2x128xf32, #tpu.memory_space<vmem>>, vector<1x1x2x128xf32>,
    return
  }
  func.func @transform_0(%arg0: i32, %arg1: i32, %arg2: memref<4xf32, #tpu.memory_space<smem>>) -> (i32, i32, i32, i32) {
    %c0_i32 = arith.constant 0 : i32
    %c0_i32_0 = arith.constant 0 : i32
    %c0_i32_1 = arith.constant 0 : i32
    return %arg0, %c0_i32, %arg1, %c0_i32_0 : i32, i32, i32, i32
  }
  func.func @transform_1(%arg0: i32, %arg1: i32, %arg2: memref<4xf32, #tpu.memory_space<smem>>) -> (i32, i32, i32, i32) {
    %c0_i32 = arith.constant 0 : i32
    %c0_i32_0 = arith.constant 0 : i32
    %c0_i32_1 = arith.constant 0 : i32
    return %arg0, %c0_i32, %arg1, %c0_i32_0 : i32, i32, i32, i32
  }
}

</mosaic_0001>

<llo_original>
// kernel: tpu_custom_call.1
$region0: #{tpu_custom_call.1}
  #allocation0 [shape = 'u32[]', space=smem, size = 0x4, offset = 0x4, fixed_abs, tag = 'smem constant byte address 0x4 - core index']
  #allocation1 [shape = 'u32[72,128]{1,0:T(1,128)}', space=vmem, size = 0x9000, scoped, tag = 'internal scratch']
  #allocation2 [shape = 's32[1]{0}', space=sflag, size = 0x4, scoped, tag = 'scoped memory for tpu_custom_call.1']
  #allocation3 [shape = 'u8[512]{0}', space=smem, size = 0x200, scoped, tag = 'prefetched SMEM operand 0']
  %s0 = inlined_call_operand.hbm [shape: f32[4], index: 0, kind: input, shape index: {}]
  %s1 = inlined_call_operand.hbm [shape: f32[2,4,2,128], index: 1, kind: input, shape index: {}]
  %s2 = inlined_call_operand.hbm [shape: f32[2,1,2,128], index: 2, kind: output, shape index: {}]
  %s3 = sld [smem:[#allocation0]]
  $region41: #{tpu_custom_call.1} parent=0
    _
  %s5 = ssub.s32 1, %s3
  %s6 = scalar_select 0, %s5, %s3
  %s8 = sshll.u32 %s0, 4
  %s9 = int_to_ptr.hbm [resolvable:$true] %s8
  %11 = dma.hbm_to_smem %s9, 16, [#allocation3], [#allocation2]
  %13 = dma.done [#allocation2], 16
  %14 = sfence
  $region1: #{tpu_custom_call.1} parent=0
    #allocation4 [shape = 'u8[8192]{0}', space=vmem, size = 0x2000, scoped, tag = 'input window, operand 1']
    #allocation5 [shape = 's32[2]{0}', space=sflag, size = 0x8, scoped, tag = 'scoped memory for tpu_custom_call.1']
    #allocation6 [shape = 's32[2]{0}', space=sflag, size = 0x8, scoped, tag = 'scoped memory for tpu_custom_call.1']
    #allocation7 [shape = 'u8[2048]{0}', space=vmem, size = 0x800, scoped, tag = 'output window, operand 0']
    %15 = vsyncpa [#allocation5], 0
    %s16 = scalar_lea.sflag [#allocation5], 1
    %17 = vsyncpa %s16, 0
    %18 = vsyncpa [#allocation6], 0
    %s19 = scalar_lea.sflag [#allocation6], 1
    %20 = vsyncpa %s19, 0
    loop: start=0, step=1, limit=4
    $region2: #{tpu_custom_call.1} parent=1 // loop_pre_header
      _
    $region3: #{tpu_custom_call.1} parent=1 // loop_header
      %s22 = sphi 0, %s26
      %p23 = scmp.ge.s32.totalorder %s22, 4
      %s29 = sphi 0, %s41
      %s30 = sphi 0, %s37
      %s31 = sphi 0, %s29
      %s32 = sphi 0, %s30
      %s33 = sphi 0, %s31
      %s34 = sphi 0, %s32
      %s46 = sphi 0, %s48
      %s49 = sphi 0, %s46
      %s50 = sphi 0, %s49
      %s66 = sphi 0, %s50
      %s74 = sphi 0, %s76
      %s77 = sphi 0, %s74
      %s78 = sphi 0, %s77
      %s94 = sphi 0, %s78
    $region4: #{tpu_custom_call.1} parent=1 // loop_header_branch
      %25 = sbr.rel (%p23) target = $region8
    $region5: #{tpu_custom_call.1} parent=1 // loop_body
      %s27 = ssub.s32 %s22, 1
      %s28 = ssub.s32 %s22, 2
      %s35 = sadd.s32 1, %s30
      %p36 = scmp.ge.s32.totalorder %s35, 1
      %s37 = scalar_select %p36, 0, %s35
      %s38 = sadd.s32 1, %s29
      %s39 = scalar_select %p36, %s38, %s29
      %p40 = scmp.ge.s32.totalorder %s39, 2
      %s41 = scalar_select %p40, 0, %s39
      %s42 = ssub.s32 %s29, %s41
      %s43 = ssub.s32 %s30, %s37
      %s44 = sor.u32 %s42, %s43
      %p45 = scmp.eq.s32.totalorder %s44, 0
      %s47 = sadd.s32 %s46, 1
      %s48 = scalar_select %p45, %s46, %s47
      %p51 = pneg %p45
      %p52 = scmp.eq.s32.totalorder %s22, 1
      %p53 = por %p51, %p52
      %p54 = scmp.ne.s32.totalorder %s46, %s49
      %p55 = scmp.eq.s32.totalorder %s22, 0
      %p56 = por %p54, %p55
      %p57 = scmp.ne.s32.totalorder %s46, %s49
      %p58 = scmp.eq.s32.totalorder %s27, 1
      %p59 = por %p57, %p58
      %p60 = scmp.ne.s32.totalorder %s49, %s50
      %p61 = scmp.eq.s32.totalorder %s27, 0
      %p62 = por %p60, %p61
      %p63 = scmp.ne.s32.totalorder %s49, %s50
      %p64 = scmp.eq.s32.totalorder %s28, 1
      %p65 = por %p63, %p64
      %p67 = scmp.ne.s32.totalorder %s50, %s66
      %p68 = scmp.eq.s32.totalorder %s28, 0
      %p69 = por %p67, %p68
      %s70 = ssub.s32 %s29, %s41
      %s71 = ssub.s32 %s30, %s37
      %s72 = sor.u32 %s70, %s71
      %p73 = scmp.eq.s32.totalorder %s72, 0
      %s75 = sadd.s32 %s74, 1
      %s76 = scalar_select %p73, %s74, %s75
      %p79 = pneg %p73
      %p80 = scmp.eq.s32.totalorder %s22, 1
      %p81 = por %p79, %p80
      %p82 = scmp.ne.s32.totalorder %s74, %s77
      %p83 = scmp.eq.s32.totalorder %s22, 0
      %p84 = por %p82, %p83
      %p85 = scmp.ne.s32.totalorder %s74, %s77
      %p86 = scmp.eq.s32.totalorder %s27, 1
      %p87 = por %p85, %p86
      %p88 = scmp.ne.s32.totalorder %s77, %s78
      %p89 = scmp.eq.s32.totalorder %s27, 0
      %p90 = por %p88, %p89
      %p91 = scmp.ne.s32.totalorder %s77, %s78
      %p92 = scmp.eq.s32.totalorder %s28, 1
      %p93 = por %p91, %p92
      %p95 = scmp.ne.s32.totalorder %s78, %s94
      %p96 = scmp.eq.s32.totalorder %s28, 0
      %p97 = por %p95, %p96
      %p98 = scmp.le.s32.totalorder 1, %s22
      %p99 = scmp.lt.s32.totalorder %s22, 3
      %p100 = pnand %p98, %p99
      %p101 = pneg %p100
      // Predicated region
      $region9: #{tpu_custom_call.1} parent=5 // pred_check
        _
      $region10: #{tpu_custom_call.1} parent=5 // pred_check_branch
        %103 = sbr.rel (%p100) target = $region12
      $region11: #{tpu_custom_call.1} parent=5 // pred_region
        %s104 = ssub.s32 %s22, 1
      $region12: #{tpu_custom_call.1} parent=5 // pred_fallthru
        _
      %p105 = scmp.lt.s32.totalorder %s22, 2
      // Predicated region
      $region13: #{tpu_custom_call.1} parent=5 // pred_check
        %p106 = pneg %p105
      $region14: #{tpu_custom_call.1} parent=5 // pred_check_branch
        %108 = sbr.rel (%p106) target = $region16
      $region15: #{tpu_custom_call.1} parent=5 // pred_region
        // Predicated region
        $region17: #{tpu_custom_call.1} parent=15 // pred_check
          %p109 = pneg %p56
        $region18: #{tpu_custom_call.1} parent=15 // pred_check_branch
          %111 = sbr.rel (%p109) target = $region20
        $region19: #{tpu_custom_call.1} parent=15 // pred_region
          %s112 = sand.u32 %s46, 1
          %s113 = scalar_lea.sflag [#allocation5], %s112
          %s114 = sand.u32 %s46, 1
          %s115 = smul.addr %s114, 8
          %s116 = scalar_lea.vmem [#allocation4], %s115
          %118 = vsyncadd %s113, 0
          %s119 = smul.addr %s29, 4
          %s120 = sadd.s32 %s30, %s119
          %s121 = smul.addr %s120, 2
          %s122 = scalar_lea.hbm %s1, %s121
          %s123 = sshll.u32 %s122, 4
          %s124 = int_to_ptr.hbm [resolvable:$true] %s123
          %s125 = sshll.u32 %s116, 4
          %s126 = int_to_ptr.vmem [resolvable:$true] %s125
          %131 = dma.hbm_to_vmem [thread:$0]  %s124, 128, %s126, %s113, 32, 32, 2
        $region20: #{tpu_custom_call.1} parent=15 // pred_fallthru
          _
      $region16: #{tpu_custom_call.1} parent=5 // pred_fallthru
        _
      %p132 = scmp.le.s32.totalorder 1, %s22
      %p133 = scmp.lt.s32.totalorder %s22, 3
      %p134 = pnand %p132, %p133
      %p135 = pneg %p134
      // Predicated region
      $region21: #{tpu_custom_call.1} parent=5 // pred_check
        _
      $region22: #{tpu_custom_call.1} parent=5 // pred_check_branch
        %137 = sbr.rel (%p134) target = $region24
      $region23: #{tpu_custom_call.1} parent=5 // pred_region
        %s138 = ssub.s32 %s22, 1
        %s139 = sand.u32 %s49, 1
        %s140 = scalar_lea.sflag [#allocation5], %s139
        %s141 = sand.u32 %s49, 1
        %s142 = smul.addr %s141, 8
        %s143 = scalar_lea.vmem [#allocation4], %s142
        // Predicated region
        $region25: #{tpu_custom_call.1} parent=23 // pred_check
          %p144 = pneg %p62
        $region26: #{tpu_custom_call.1} parent=23 // pred_check_branch
          %146 = sbr.rel (%p144) target = $region28
        $region27: #{tpu_custom_call.1} parent=23 // pred_region
          %148 = dma.done %s140, 128
        $region28: #{tpu_custom_call.1} parent=23 // pred_fallthru
          _
        %s149 = sand.u32 %s49, 1
        %s150 = scalar_lea.sflag [#allocation5], %s149
        %s151 = sand.u32 %s49, 1
        %s152 = smul.addr %s151, 8
        %s153 = scalar_lea.vmem [#allocation4], %s152
        %p154 = pneg %p62
        %p155 = pneg %p59
        %p156 = pneg %p90
        %p157 = pneg %p87
        %s158 = sand.u32 %s77, 1
        %s159 = scalar_lea.sflag [#allocation6], %s158
        %s160 = sand.u32 %s77, 1
        %s161 = smul.addr %s160, 2
        %s162 = scalar_lea.vmem [#allocation7], %s161
        %v163 = vld [vmem:[%s143] sm:$0x3]
        %s164 = sld [smem:[#allocation3]]
        %v165 = vstv %s164
        %v166 = vmul.f32 %v163, %v165
        %s167 = scalar_lea.vmem %s143, 2 [#allocation4]
        %v168 = vld [vmem:[%s167] sm:$0x3]
        %s169 = sld [smem:[#allocation3 + $0x1]]
        %v170 = vstv %s169
        %v171 = vmul.f32 %v168, %v170
        %v172 = vadd.f32 %v166, %v171
        %s173 = scalar_lea.vmem %s143, 4 [#allocation4]
        %v174 = vld [vmem:[%s173] sm:$0x3]
        %s175 = sld [smem:[#allocation3 + $0x2]]
        %v176 = vstv %s175
        %v177 = vmul.f32 %v174, %v176
        %v178 = vadd.f32 %v172, %v177
        %s179 = scalar_lea.vmem %s143, 6 [#allocation4]
        %v180 = vld [vmem:[%s179] sm:$0x3]
        %s181 = sld [smem:[#allocation3 + $0x3]]
        %v182 = vstv %s181
        %v183 = vmul.f32 %v180, %v182
        %v184 = vadd.f32 %v178, %v183
        %185 = vst [vmem:[%s162] sm:$0x3] %v184
        %s186 = sand.u32 %s77, 1
        %s187 = scalar_lea.sflag [#allocation6], %s186
        %s188 = sand.u32 %s77, 1
        %s189 = smul.addr %s188, 2
        %s190 = scalar_lea.vmem [#allocation7], %s189
        // Predicated region
        $region29: #{tpu_custom_call.1} parent=23 // pred_check
          %p191 = pneg %p87
        $region30: #{tpu_custom_call.1} parent=23 // pred_check_branch
          %193 = sbr.rel (%p191) target = $region32
        $region31: #{tpu_custom_call.1} parent=23 // pred_region
          %195 = vsyncadd %s187, 0
          %s196 = sadd.s32 %s32, %s31
          %s197 = smul.addr %s196, 2
          %s198 = scalar_lea.hbm %s2, %s197
          %s200 = sshll.u32 %s190, 4
          %s201 = int_to_ptr.vmem [resolvable:$true] %s200
          %s202 = sshll.u32 %s198, 4
          %s203 = int_to_ptr.hbm [resolvable:$true] %s202
          %205 = dma.vmem_to_hbm [thread:$0]  %s201, 32, %s203, %s187
        $region32: #{tpu_custom_call.1} parent=23 // pred_fallthru
          _
      $region24: #{tpu_custom_call.1} parent=5 // pred_fallthru
        _
      %p206 = scmp.le.s32.totalorder 2, %s22
      // Predicated region
      $region33: #{tpu_custom_call.1} parent=5 // pred_check
        %p207 = pneg %p206
      $region34: #{tpu_custom_call.1} parent=5 // pred_check_branch
        %209 = sbr.rel (%p207) target = $region36
      $region35: #{tpu_custom_call.1} parent=5 // pred_region
        %s210 = ssub.s32 %s22, 2
        // Predicated region
        $region37: #{tpu_custom_call.1} parent=35 // pred_check
          %p211 = pneg %p93
        $region38: #{tpu_custom_call.1} parent=35 // pred_check_branch
          %213 = sbr.rel (%p211) target = $region40
        $region39: #{tpu_custom_call.1} parent=35 // pred_region
          %s214 = sand.u32 %s78, 1
          %s215 = scalar_lea.sflag [#allocation6], %s214
          %s216 = sand.u32 %s78, 1
          %s217 = smul.addr %s216, 2
          %s218 = scalar_lea.vmem [#allocation7], %s217
          %220 = dma.done %s215, 32
        $region40: #{tpu_custom_call.1} parent=35 // pred_fallthru
          _
      $region36: #{tpu_custom_call.1} parent=5 // pred_fallthru
        _
    $region6: #{tpu_custom_call.1} parent=1 // loop_footer
      %s26 = sadd.s32 1, %s22
    $region7: #{tpu_custom_call.1} parent=1 // loop_footer_branch
      %21 = sbr.rel target = $region3
    $region8: #{tpu_custom_call.1} parent=1 // loop_exit
      _
    %221 = vsyncpa [#allocation5], 1
    %s222 = scalar_lea.sflag [#allocation5], 1
    %223 = vsyncpa %s222, 1
    %224 = vsyncpa [#allocation6], 1
    %s225 = scalar_lea.sflag [#allocation6], 1
    %226 = vsyncpa %s225, 1

</llo_original>
